<compile_context>
chip_gen: v6e
topology: v6e:2x2x1
jax: 0.10.0
libtpu: 0.0.40
codegen_flags: <defaults>
</compile_context>

<pallas_src>
import functools

import jax
import jax.numpy as jnp
from jax.experimental import pallas as pl
from jax.experimental.pallas import tpu as pltpu


def _round_up(x, m):
    return ((x + m - 1) // m) * m


def _quant_kernel(z_ref, u_ref, cblk_ref, cw_ref, o_ref, *,
                  inv_temperature, num_groups, group_size):
    S, G = num_groups, group_size

    # All (s, g) logits from one lane-dense MXU matmul against the block-diagonal
    # codebook:  logits[n, s*G+g] = sum_d z[n, s*D+d] * C[g, d]
    logits = jnp.dot(z_ref[...], cblk_ref[...],
                     preferred_element_type=jnp.float32)               # (TM, S*G)

    # Gumbel noise from uniform(0,1) samples, same formula as the reference.
    u = u_ref[...].astype(jnp.float32)
    gumbel = -jnp.log(-jnp.log(u + 1e-9) + 1e-9)
    logits = (logits + gumbel) * inv_temperature

    # Per-s softmax over g, assembled as adjacent lane columns of w_all.
    cols = []
    for s in range(S):                                                 # S == 2, static unroll
        ls = logits[:, s * G:(s + 1) * G]                              # (TM, G)
        if G == 2:
            # 2-way softmax == sigmoid of the logit difference (EUP; no cross-lane max/sum).
            w1 = 1.0 / (1.0 + jnp.exp(ls[:, 0:1] - ls[:, 1:2]))
            cols.extend([1.0 - w1, w1])
        else:
            m = jnp.max(ls, axis=-1, keepdims=True)
            e = jnp.exp(ls - m)
            w = e / jnp.sum(e, axis=-1, keepdims=True)
            cols.extend([w[:, g:g + 1] for g in range(G)])
    w_all = jnp.concatenate(cols, axis=1)                              # (TM, S*G)

    # Folded quantize + linear projection (+ bias/S per row): one tiny-K MXU matmul
    # instead of S*G broadcast-FMA passes over the (TM, P) accumulator.
    acc = jnp.dot(w_all, cw_ref[...], preferred_element_type=jnp.float32)
    o_ref[...] = acc.astype(o_ref.dtype)


def quantization_forward(z, codebooks, weight, bias, temperature, *,
                         noise_key=None, uniform_noise=None, tm=1024):
    """z: (B, T, num_codebooks*code_dim) -> (B, T, output_dim)."""
    B, T, F = z.shape
    G, V, D = codebooks.shape
    S = 2  # the reference forward hardcodes z.view(B, T, 2, 256)
    assert F == S * D == weight.shape[1], "module requires num_codebooks*code_dim == 2*256"
    P = weight.shape[0]
    BT = B * T
    f32 = jnp.float32

    # ---- grid-invariant preprocessing hoisted out of the kernel (all tiny) ----
    # The reference einsums sum over the code index v, so only C = sum_v codebooks is needed.
    C = jnp.sum(codebooks.astype(f32), axis=1)                          # (G, D)
    # Block-diagonal codebook so both s-groups' logits come from one matmul.
    zero_blk = jnp.zeros((D, G), f32)
    Cblk = jnp.block([[C.T if si == sj else zero_blk for sj in range(S)]
                      for si in range(S)]).astype(z.dtype)              # (S*D, S*G)
    # Fold quantize + linear projection: CW[s*G+g, p] = sum_d C[g, d] * W[p, s*D+d];
    # also fold the bias (each per-s softmax sums to 1, so +bias/S per row adds bias once).
    CW = jnp.einsum('gd,psd->sgp', C, weight.astype(f32).reshape(P, S, D),
                    precision=jax.lax.Precision.HIGHEST).reshape(S * G, P)
    CW = CW + (bias.astype(f32) / S)[None, :]

    # ---- row tiling: no padding; Pallas clamps/masks the ragged final block ----
    tm_eff = min(tm, _round_up(BT, 8))
    n_tiles = pl.cdiv(BT, tm_eff)

    z2 = z.reshape(BT, F)
    if uniform_noise is None:
        if noise_key is None:
            raise ValueError("provide noise_key or uniform_noise")
        # TODO(synk): generate in-kernel with pltpu.prng_seed/prng_random_bits to drop this
        # tiny (BT, 4) stream entirely; kept wrapper-side (negligible HBM traffic).
        u = jax.random.uniform(noise_key, (BT, S * G), dtype=f32)
    else:
        u = uniform_noise.reshape(BT, S * G).astype(f32)

    kernel = functools.partial(_quant_kernel,
                               inv_temperature=1.0 / float(temperature),
                               num_groups=S, group_size=G)

    compiler_kwargs = dict(dimension_semantics=("parallel",))
    itemsize = jnp.dtype(z.dtype).itemsize
    vmem_est = 2 * tm_eff * ((F + P) * itemsize + S * G * 4) + (4 << 20)
    if vmem_est > (16 << 20):  # only override when beyond the smallest scoped default (v5e)
        compiler_kwargs["vmem_limit_bytes"] = int(vmem_est)

    out = pl.pallas_call(
        kernel,
        out_shape=jax.ShapeDtypeStruct((BT, P), z.dtype),
        grid_spec=pltpu.PrefetchScalarGridSpec(
            num_scalar_prefetch=0,
            grid=(n_tiles,),
            in_specs=[
                pl.BlockSpec((tm_eff, F), lambda i: (i, 0)),        # z rows (dominant HBM stream)
                pl.BlockSpec((tm_eff, S * G), lambda i: (i, 0)),    # uniform noise
                pl.BlockSpec((S * D, S * G), lambda i: (0, 0)),     # block-diag codebook (resident)
                pl.BlockSpec((S * G, P), lambda i: (0, 0)),         # folded projection + bias table
            ],
            out_specs=pl.BlockSpec((tm_eff, P), lambda i: (i, 0)),
        ),
        compiler_params=pltpu.CompilerParams(**compiler_kwargs),
    )(z2, u, Cblk, CW)

    return out.reshape(B, T, P)


def _reference(z, codebooks, weight, bias, temperature, u):
    """Pure-JAX mirror of the PyTorch module with the same noise."""
    hp = jax.lax.Precision.HIGHEST
    B, T, F = z.shape
    D = codebooks.shape[-1]
    z4 = z.reshape(B, T, 2, D)
    logits = jnp.einsum('btsd,gvd->btsg', z4, codebooks, precision=hp)
    gumbel = -jnp.log(-jnp.log(u + 1e-9) + 1e-9)
    sw = jax.nn.softmax((logits + gumbel) / temperature, axis=-1)
    q = jnp.einsum('btsg,gvd->btsd', sw, codebooks, precision=hp).reshape(B, T, F)
    return jnp.einsum('btf,pf->btp', q, weight, precision=hp) + bias


if __name__ == "__main__":
    # Module hyperparameters (the forward hardcodes the (2, 256) view).
    num_codebooks, num_codes, code_dim, output_dim = 2, 8, 256, 256
    temperature = 1.0

    key = jax.random.PRNGKey(0)
    k_cb, k_w, k_b, k_z, k_noise, k_z2, k_noise2 = jax.random.split(key, 7)

    codebooks = jax.random.normal(k_cb, (num_codebooks, num_codes, code_dim), jnp.float32)
    fan_in = num_codebooks * code_dim
    bound = 1.0 / (fan_in ** 0.5)
    W = jax.random.uniform(k_w, (output_dim, fan_in), jnp.float32, -bound, bound)
    b = jax.random.uniform(k_b, (output_dim,), jnp.float32, -bound, bound)

    # --- test 1: tile-aligned batch ---
    B, T = 2, 8
    z = jax.random.normal(k_z, (B, T, fan_in), jnp.float32)
    u = jax.random.uniform(k_noise, (B, T, 2, num_codebooks), jnp.float32)

    out = quantization_forward(z, codebooks, W, b, temperature, uniform_noise=u)
    jax.block_until_ready(out)
    ref = _reference(z, codebooks, W, b, temperature, u)

    assert out.shape == (B, T, output_dim)
    assert bool(jnp.all(jnp.isfinite(out)))
    assert bool(jnp.allclose(out, ref, rtol=2e-2, atol=2e-2)), \
        ("max abs err", float(jnp.max(jnp.abs(out - ref))))

    # --- test 2: ragged row count (exercises the clamped/masked final block, no padding) ---
    B2, T2 = 3, 5
    z_r = jax.random.normal(k_z2, (B2, T2, fan_in), jnp.float32)
    u_r = jax.random.uniform(k_noise2, (B2, T2, 2, num_codebooks), jnp.float32)

    out_r = quantization_forward(z_r, codebooks, W, b, temperature, uniform_noise=u_r)
    jax.block_until_ready(out_r)
    ref_r = _reference(z_r, codebooks, W, b, temperature, u_r)

    assert out_r.shape == (B2, T2, output_dim)
    assert bool(jnp.all(jnp.isfinite(out_r)))
    assert bool(jnp.allclose(out_r, ref_r, rtol=2e-2, atol=2e-2)), \
        ("max abs err (ragged)", float(jnp.max(jnp.abs(out_r - ref_r))))

    print("KERNEL_OK")
</pallas_src>

<mosaic_0001>
module attributes {stable_mosaic.version = 11 : i64} {
  func.func @_quant_kernel(%arg0: i32, %arg1: memref<16x512xf32, #tpu.memory_space<vmem>>, %arg2: memref<16x4xf32, #tpu.memory_space<vmem>>, %arg3: memref<512x4xf32, #tpu.memory_space<vmem>>, %arg4: memref<4x256xf32, #tpu.memory_space<vmem>>, %arg5: memref<16x256xf32, #tpu.memory_space<vmem>>) attributes {dimension_semantics = [#tpu.dimension_semantics<parallel>], iteration_bounds = array<i64: 1>, scalar_prefetch = 0 : i64, scratch_operands = 0 : i64, tpu.core_type = #tpu.core_type<tc>, window_params = [{transform_indices = @transform_0, window_bounds = array<i64: 16, 512>}, {transform_indices = @transform_1, window_bounds = array<i64: 16, 4>}, {pipeline_mode = #tpu.pipeline_mode<synchronous>, transform_indices = @transform_2, window_bounds = array<i64: 512, 4>}, {pipeline_mode = #tpu.pipeline_mode<synchronous>, transform_indices = @transform_3, window_bounds = array<i64: 4, 256>}, {transform_indices = @transform_4, window_bounds = array<i64: 16, 256>}]} {
    %c0 = arith.constant 0 : index
    %c0_0 = arith.constant 0 : index
    %0 = vector.load %arg1[%c0, %c0_0] : memref<16x512xf32, #tpu.memory_space<vmem>>, vector<16x512xf32>
    %c0_1 = arith.constant 0 : index
    %c0_2 = arith.constant 0 : index
    %1 = vector.load %arg3[%c0_1, %c0_2] : memref<512x4xf32, #tpu.memory_space<vmem>>, vector<512x4xf32>
    %cst = arith.constant dense<0.000000e+00> : vector<16x4xf32>
    %2 = tpu.matmul %0, %1, %cst {dimension_numbers = #tpu.dot_dimension_numbers<[1], [0], [0], [1], [0, 0, 1, 1], [], []>} : vector<16x512xf32>, vector<512x4xf32>, vector<16x4xf32> -> vector<16x4xf32>
    %c0_3 = arith.constant 0 : index
    %c0_4 = arith.constant 0 : index
    %3 = vector.load %arg2[%c0_3, %c0_4] : memref<16x4xf32, #tpu.memory_space<vmem>>, vector<16x4xf32>
    %cst_5 = arith.constant 9.99999971E-10 : f32
    %4 = vector.broadcast %cst_5 : f32 to vector<16x4xf32>
    %5 = arith.addf %3, %4 : vector<16x4xf32>
    %6 = math.log %5 : vector<16x4xf32>
    %cst_6 = arith.constant 0.000000e+00 : f32
    %7 = vector.broadcast %cst_6 : f32 to vector<16x4xf32>
    %8 = arith.subf %7, %6 : vector<16x4xf32>
    %cst_7 = arith.constant 9.99999971E-10 : f32
    %9 = vector.broadcast %cst_7 : f32 to vector<16x4xf32>
    %10 = arith.addf %8, %9 : vector<16x4xf32>
    %11 = math.log %10 : vector<16x4xf32>
    %cst_8 = arith.constant 0.000000e+00 : f32
    %12 = vector.broadcast %cst_8 : f32 to vector<16x4xf32>
    %13 = arith.subf %12, %11 : vector<16x4xf32>
    %14 = arith.addf %2, %13 : vector<16x4xf32>
    %cst_9 = arith.constant 1.000000e+00 : f32
    %15 = vector.broadcast %cst_9 : f32 to vector<16x4xf32>
    %16 = arith.mulf %14, %15 : vector<16x4xf32>
    %17 = vector.extract_strided_slice %16 {offsets = [0, 0], sizes = [16, 2], strides = [1, 1]} : vector<16x4xf32> to vector<16x2xf32>
    %18 = vector.extract_strided_slice %17 {offsets = [0, 0], sizes = [16, 1], strides = [1, 1]} : vector<16x2xf32> to vector<16x1xf32>
    %19 = vector.extract_strided_slice %17 {offsets = [0, 1], sizes = [16, 1], strides = [1, 1]} : vector<16x2xf32> to vector<16x1xf32>
    %20 = arith.subf %18, %19 : vector<16x1xf32>
    %21 = math.exp %20 : vector<16x1xf32>
    %cst_10 = arith.constant 1.000000e+00 : f32
    %22 = vector.broadcast %cst_10 : f32 to vector<16x1xf32>
    %23 = arith.addf %22, %21 : vector<16x1xf32>
    %cst_11 = arith.constant 1.000000e+00 : f32
    %24 = vector.broadcast %cst_11 : f32 to vector<16x1xf32>
    %25 = arith.divf %24, %23 : vector<16x1xf32>
    %cst_12 = arith.constant 1.000000e+00 : f32
    %26 = vector.broadcast %cst_12 : f32 to vector<16x1xf32>
    %27 = arith.subf %26, %25 : vector<16x1xf32>
    %28 = vector.extract_strided_slice %16 {offsets = [0, 2], sizes = [16, 2], strides = [1, 1]} : vector<16x4xf32> to vector<16x2xf32>
    %29 = vector.extract_strided_slice %28 {offsets = [0, 0], sizes = [16, 1], strides = [1, 1]} : vector<16x2xf32> to vector<16x1xf32>
    %30 = vector.extract_strided_slice %28 {offsets = [0, 1], sizes = [16, 1], strides = [1, 1]} : vector<16x2xf32> to vector<16x1xf32>
    %31 = arith.subf %29, %30 : vector<16x1xf32>
    %32 = math.exp %31 : vector<16x1xf32>
    %cst_13 = arith.constant 1.000000e+00 : f32
    %33 = vector.broadcast %cst_13 : f32 to vector<16x1xf32>
    %34 = arith.addf %33, %32 : vector<16x1xf32>
    %cst_14 = arith.constant 1.000000e+00 : f32
    %35 = vector.broadcast %cst_14 : f32 to vector<16x1xf32>
    %36 = arith.divf %35, %34 : vector<16x1xf32>
    %cst_15 = arith.constant 1.000000e+00 : f32
    %37 = vector.broadcast %cst_15 : f32 to vector<16x1xf32>
    %38 = arith.subf %37, %36 : vector<16x1xf32>
    %39 = tpu.concatenate %27, %25, %38, %36 in 1 : vector<16x1xf32>, vector<16x1xf32>, vector<16x1xf32>, vector<16x1xf32> -> vector<16x4xf32>
    %c0_16 = arith.constant 0 : index
    %c0_17 = arith.constant 0 : index
    %40 = vector.load %arg4[%c0_16, %c0_17] : memref<4x256xf32, #tpu.memory_space<vmem>>, vector<4x256xf32>
    %cst_18 = arith.constant dense<0.000000e+00> : vector<16x256xf32>
    %41 = tpu.matmul %39, %40, %cst_18 {dimension_numbers = #tpu.dot_dimension_numbers<[1], [0], [0], [1], [0, 0, 1, 1], [], []>} : vector<16x4xf32>, vector<4x256xf32>, vector<16x256xf32> -> vector<16x256xf32>
    %c0_19 = arith.constant 0 : index
    %c0_20 = arith.constant 0 : index
    %42 = vector.load %arg5[%c0_19, %c0_20] : memref<16x256xf32, #tpu.memory_space<vmem>>, vector<16x256xf32>
    tpu.vector_store %arg5[%c0_19, %c0_20], %41 {strides = array<i32>} : memref<16x256xf32, #tpu.memory_space<vmem>>, vector<16x256xf32>,
    return
  }
  func.func @transform_0(%arg0: i32) -> (i32, i32) {
    %c0_i32 = arith.constant 0 : i32
    %c0_i32_0 = arith.constant 0 : i32
    return %arg0, %c0_i32 : i32, i32
  }
  func.func @transform_1(%arg0: i32) -> (i32, i32) {
    %c0_i32 = arith.constant 0 : i32
    %c0_i32_0 = arith.constant 0 : i32
    return %arg0, %c0_i32 : i32, i32
  }
  func.func @transform_2(%arg0: i32) -> (i32, i32) {
    %c0_i32 = arith.constant 0 : i32
    %c0_i32_0 = arith.constant 0 : i32
    %c0_i32_1 = arith.constant 0 : i32
    return %c0_i32, %c0_i32_0 : i32, i32
  }
  func.func @transform_3(%arg0: i32) -> (i32, i32) {
    %c0_i32 = arith.constant 0 : i32
    %c0_i32_0 = arith.constant 0 : i32
    %c0_i32_1 = arith.constant 0 : i32
    return %c0_i32, %c0_i32_0 : i32, i32
  }
  func.func @transform_4(%arg0: i32) -> (i32, i32) {
    %c0_i32 = arith.constant 0 : i32
    %c0_i32_0 = arith.constant 0 : i32
    return %arg0, %c0_i32 : i32, i32
  }
}

</mosaic_0001>

<llo_original>
// kernel: tpu_custom_call.1
$region0: #{tpu_custom_call.1}
  #allocation0 [shape = 'u32[]', space=smem, size = 0x4, offset = 0x4, fixed_abs, tag = 'smem constant byte address 0x4 - core index']
  #allocation1 [shape = 'u32[144,128]{1,0:T(1,128)}', space=vmem, size = 0x12000, scoped, tag = 'internal scratch']
  %s0 = inlined_call_operand.vmem [shape: f32[16,512], index: 0, kind: input, shape index: {}]
  %s1 = inlined_call_operand.vmem [shape: f32[16,4], index: 1, kind: input, shape index: {}]
  %s2 = inlined_call_operand.vmem [shape: f32[512,4], index: 2, kind: input, shape index: {}]
  %s3 = inlined_call_operand.vmem [shape: f32[4,256], index: 3, kind: input, shape index: {}]
  %s4 = inlined_call_operand.hbm [shape: f32[16,256], index: 4, kind: output, shape index: {}]
  %s5 = sld [smem:[#allocation0]]
  $region26: #{tpu_custom_call.1} parent=0
    _
  %s7 = ssub.s32 1, %s5
  %s8 = scalar_select 0, %s7, %s5
  $region1: #{tpu_custom_call.1} parent=0
    #allocation2 [shape = 'u8[16384]{0}', space=vmem, size = 0x4000, scoped, tag = 'output window, operand 0, single buffered']
    #allocation3 [shape = 's32[1]{0}', space=sflag, size = 0x4, scoped, tag = 'scoped memory for tpu_custom_call.1']
    %9 = vsyncpa [#allocation3], 0
    // Predicated region
    $region2: #{tpu_custom_call.1} parent=1 // pred_check
      _
    $region3: #{tpu_custom_call.1} parent=1 // pred_check_branch
      %11 = sbr.rel (0) target = $region5
    $region4: #{tpu_custom_call.1} parent=1 // pred_region
      _
    $region5: #{tpu_custom_call.1} parent=1 // pred_fallthru
      _
    // Predicated region
    $region6: #{tpu_custom_call.1} parent=1 // pred_check
      _
    $region7: #{tpu_custom_call.1} parent=1 // pred_check_branch
      %13 = sbr.rel (0) target = $region9
    $region8: #{tpu_custom_call.1} parent=1 // pred_region
      _
    $region9: #{tpu_custom_call.1} parent=1 // pred_fallthru
      _
    // Predicated region
    $region10: #{tpu_custom_call.1} parent=1 // pred_check
      _
    $region11: #{tpu_custom_call.1} parent=1 // pred_check_branch
      %15 = sbr.rel (0) target = $region13
    $region12: #{tpu_custom_call.1} parent=1 // pred_region
      _
    $region13: #{tpu_custom_call.1} parent=1 // pred_fallthru
      _
    // Predicated region
    $region14: #{tpu_custom_call.1} parent=1 // pred_check
      _
    $region15: #{tpu_custom_call.1} parent=1 // pred_check_branch
      %17 = sbr.rel (0) target = $region17
    $region16: #{tpu_custom_call.1} parent=1 // pred_region
      _
    $region17: #{tpu_custom_call.1} parent=1 // pred_fallthru
      _
    %v18 = vld [vmem:[%s0] sm:$0xff]
    %v19 = vld [vmem:[%s0 + $0x8] sm:$0xff]
    %v20 = vld [vmem:[%s0 + $0x10] sm:$0xff]
    %v21 = vld [vmem:[%s0 + $0x18] sm:$0xff]
    %v22 = vld [vmem:[%s0 + $0x20] sm:$0xff]
    %v23 = vld [vmem:[%s0 + $0x28] sm:$0xff]
    %v24 = vld [vmem:[%s0 + $0x30] sm:$0xff]
    %v25 = vld [vmem:[%s0 + $0x38] sm:$0xff]
    %v26 = vld [vmem:[%s2] sm:$0xff]
    %v27 = vld [vmem:[%s2 + $0x8] sm:$0xff]
    %v28 = vld [vmem:[%s2 + $0x10] sm:$0xff]
    %v29 = vld [vmem:[%s2 + $0x18] sm:$0xff]
    %v30 = vld [vmem:[%s2 + $0x20] sm:$0xff]
    %v31 = vld [vmem:[%s2 + $0x28] sm:$0xff]
    %v32 = vld [vmem:[%s2 + $0x30] sm:$0xff]
    %v33 = vld [vmem:[%s2 + $0x38] sm:$0xff]
    %v34 = vld [vmem:[%s2 + $0x40] sm:$0xff]
    %v35 = vld [vmem:[%s2 + $0x48] sm:$0xff]
    %v36 = vld [vmem:[%s2 + $0x50] sm:$0xff]
    %v37 = vld [vmem:[%s2 + $0x58] sm:$0xff]
    %v38 = vld [vmem:[%s2 + $0x60] sm:$0xff]
    %v39 = vld [vmem:[%s2 + $0x68] sm:$0xff]
    %v40 = vld [vmem:[%s2 + $0x70] sm:$0xff]
    %v41 = vld [vmem:[%s2 + $0x78] sm:$0xff]
    %v42 = vld [vmem:[%s2 + $0x80] sm:$0xff]
    %v43 = vld [vmem:[%s2 + $0x88] sm:$0xff]
    %v44 = vld [vmem:[%s2 + $0x90] sm:$0xff]
    %v45 = vld [vmem:[%s2 + $0x98] sm:$0xff]
    %v46 = vld [vmem:[%s2 + $0xa0] sm:$0xff]
    %v47 = vld [vmem:[%s2 + $0xa8] sm:$0xff]
    %v48 = vld [vmem:[%s2 + $0xb0] sm:$0xff]
    %v49 = vld [vmem:[%s2 + $0xb8] sm:$0xff]
    %v50 = vld [vmem:[%s2 + $0xc0] sm:$0xff]
    %v51 = vld [vmem:[%s2 + $0xc8] sm:$0xff]
    %v52 = vld [vmem:[%s2 + $0xd0] sm:$0xff]
    %v53 = vld [vmem:[%s2 + $0xd8] sm:$0xff]
    %v54 = vld [vmem:[%s2 + $0xe0] sm:$0xff]
    %v55 = vld [vmem:[%s2 + $0xe8] sm:$0xff]
    %v56 = vld [vmem:[%s2 + $0xf0] sm:$0xff]
    %v57 = vld [vmem:[%s2 + $0xf8] sm:$0xff]
    %v58 = vld [vmem:[%s2 + $0x100] sm:$0xff]
    %v59 = vld [vmem:[%s2 + $0x108] sm:$0xff]
    %v60 = vld [vmem:[%s2 + $0x110] sm:$0xff]
    %v61 = vld [vmem:[%s2 + $0x118] sm:$0xff]
    %v62 = vld [vmem:[%s2 + $0x120] sm:$0xff]
    %v63 = vld [vmem:[%s2 + $0x128] sm:$0xff]
    %v64 = vld [vmem:[%s2 + $0x130] sm:$0xff]
    %v65 = vld [vmem:[%s2 + $0x138] sm:$0xff]
    %v66 = vld [vmem:[%s2 + $0x140] sm:$0xff]
    %v67 = vld [vmem:[%s2 + $0x148] sm:$0xff]
    %v68 = vld [vmem:[%s2 + $0x150] sm:$0xff]
    %v69 = vld [vmem:[%s2 + $0x158] sm:$0xff]
    %v70 = vld [vmem:[%s2 + $0x160] sm:$0xff]
    %v71 = vld [vmem:[%s2 + $0x168] sm:$0xff]
    %v72 = vld [vmem:[%s2 + $0x170] sm:$0xff]
    %v73 = vld [vmem:[%s2 + $0x178] sm:$0xff]
    %v74 = vld [vmem:[%s2 + $0x180] sm:$0xff]
    %v75 = vld [vmem:[%s2 + $0x188] sm:$0xff]
    %v76 = vld [vmem:[%s2 + $0x190] sm:$0xff]
    %v77 = vld [vmem:[%s2 + $0x198] sm:$0xff]
    %v78 = vld [vmem:[%s2 + $0x1a0] sm:$0xff]
    %v79 = vld [vmem:[%s2 + $0x1a8] sm:$0xff]
    %v80 = vld [vmem:[%s2 + $0x1b0] sm:$0xff]
    %v81 = vld [vmem:[%s2 + $0x1b8] sm:$0xff]
    %v82 = vld [vmem:[%s2 + $0x1c0] sm:$0xff]
    %v83 = vld [vmem:[%s2 + $0x1c8] sm:$0xff]
    %v84 = vld [vmem:[%s2 + $0x1d0] sm:$0xff]
    %v85 = vld [vmem:[%s2 + $0x1d8] sm:$0xff]
    %v86 = vld [vmem:[%s2 + $0x1e0] sm:$0xff]
    %v87 = vld [vmem:[%s2 + $0x1e8] sm:$0xff]
    %v88 = vld [vmem:[%s2 + $0x1f0] sm:$0xff]
    %v89 = vld [vmem:[%s2 + $0x1f8] sm:$0xff]
    %v90 = vld [vmem:[%s1] sm:$0xff]
    %v91 = vld [vmem:[%s1 + $0x8] sm:$0xff]
    %v92 = vadd.f32 %v90, 1e-09
    %v93 = vadd.f32 %v91, 1e-09
    %v94 = vlog2.pop %v92
    %v95 = vmul.f32 %v94, 0.6931472
    %v96 = vlog2.pop %v93
    %v97 = vmul.f32 %v96, 0.6931472
    %v98 = vsub.f32 0.0, %v95
    %v99 = vsub.f32 0.0, %v97
    %v100 = vadd.f32 %v98, 1e-09
    %v101 = vadd.f32 %v99, 1e-09
    %v102 = vlog2.pop %v100
    %v103 = vmul.f32 %v102, 0.6931472
    %v104 = vlog2.pop %v101
    %v105 = vmul.f32 %v104, 0.6931472
    %v106 = vsub.f32 0.0, %v103
    %v107 = vsub.f32 0.0, %v105
    %108 = vmatprep.subr.mxu0 0.0
    %109 = vmatpush1.msra.mxu0 %v41
    %110 = vmatprep.subr.mxu0 0.0
    %111 = vmatpush1.msra.mxu0 %v40
    %112 = vmatprep.subr.mxu0 0.0
    %113 = vmatpush1.msra.mxu0 %v39
    %114 = vmatprep.subr.mxu0 0.0
    %115 = vmatpush1.msra.mxu0 %v38
    %116 = vmatprep.subr.mxu0 0.0
    %117 = vmatpush1.msra.mxu0 %v37
    %118 = vmatprep.subr.mxu0 0.0
    %119 = vmatpush1.msra.mxu0 %v36
    %120 = vmatprep.subr.mxu0 0.0
    %121 = vmatpush1.msra.mxu0 %v35
    %122 = vmatprep.subr.mxu0 0.0
    %123 = vmatpush1.msra.mxu0 %v34
    %124 = vmatprep.subr.mxu0 0.0
    %125 = vmatpush1.msra.mxu0 %v33
    %126 = vmatprep.subr.mxu0 0.0
    %127 = vmatpush1.msra.mxu0 %v32
    %128 = vmatprep.subr.mxu0 0.0
    %129 = vmatpush1.msra.mxu0 %v31
    %130 = vmatprep.subr.mxu0 0.0
    %131 = vmatpush1.msra.mxu0 %v30
    %132 = vmatprep.subr.mxu0 0.0
    %133 = vmatpush1.msra.mxu0 %v29
    %134 = vmatprep.subr.mxu0 0.0
    %135 = vmatpush1.msra.mxu0 %v28
    %136 = vmatprep.subr.mxu0 0.0
    %137 = vmatpush1.msra.mxu0 %v27
    %138 = vmatprep.subr.mxu0 0.0
    %139 = vmatpush1.msra.mxu0 %v26
    %140 = vmatprep.subr.mxu0 0.0
    %141 = vmatpush2.msra.mxu0 %v57
    %142 = vmatprep.subr.mxu0 0.0
    %143 = vmatpush2.msra.mxu0 %v56
    %144 = vmatprep.subr.mxu0 0.0
    %145 = vmatpush2.msra.mxu0 %v55
    %146 = vmatprep.subr.mxu0 0.0
    %147 = vmatpush2.msra.mxu0 %v54
    %148 = vmatprep.subr.mxu0 0.0
    %149 = vmatpush2.msra.mxu0 %v53
    %150 = vmatprep.subr.mxu0 0.0
    %151 = vmatpush2.msra.mxu0 %v52
    %152 = vmatprep.subr.mxu0 0.0
    %153 = vmatpush2.msra.mxu0 %v51
    %154 = vmatprep.subr.mxu0 0.0
    %155 = vmatpush2.msra.mxu0 %v50
    %156 = vmatprep.subr.mxu0 0.0
    %157 = vmatpush2.msra.mxu0 %v49
    %158 = vmatprep.subr.mxu0 0.0
    %159 = vmatpush2.msra.mxu0 %v48
    %160 = vmatprep.subr.mxu0 0.0
    %161 = vmatpush2.msra.mxu0 %v47
    %162 = vmatprep.subr.mxu0 0.0
    %163 = vmatpush2.msra.mxu0 %v46
    %164 = vmatprep.subr.mxu0 0.0
    %165 = vmatpush2.msra.mxu0 %v45
    %166 = vmatprep.subr.mxu0 0.0
    %167 = vmatpush2.msra.mxu0 %v44
    %168 = vmatprep.subr.mxu0 0.0
    %169 = vmatpush2.msra.mxu0 %v43
    %170 = vmatprep.subr.mxu0 0.0
    %171 = vmatpush2.msra.mxu0 %v42
    %172 = vmatprep.mubr.f32.mxu0 %v19
    %173 = vmatmul.mubr.f32.gmra.mxu0 %v18
    %v174 = vpop.f32.mrf.mxu0
    %v175 = vadd.f32 %v106, %v174
    %v176 = vpop.f32.mrf.mxu0
    %177 = vmatprep.mubr.f32.mxu0 %v23
    %178 = vmatmul.mubr.f32.gmra.mxu0 %v22
    %v179 = vpop.f32.mrf.mxu0
    %v180 = vadd.f32 %v107, %v179
    %v181 = vpop.f32.mrf.mxu0
    %182 = vdwg.mxu0
    %183 = vmatprep.subr.mxu0 0.0
    %184 = vmatpush1.msra.mxu0 %v73
    %185 = vmatprep.subr.mxu0 0.0
    %186 = vmatpush1.msra.mxu0 %v72
    %187 = vmatprep.subr.mxu0 0.0
    %188 = vmatpush1.msra.mxu0 %v71
    %189 = vmatprep.subr.mxu0 0.0
    %190 = vmatpush1.msra.mxu0 %v70
    %191 = vmatprep.subr.mxu0 0.0
    %192 = vmatpush1.msra.mxu0 %v69
    %193 = vmatprep.subr.mxu0 0.0
    %194 = vmatpush1.msra.mxu0 %v68
    %195 = vmatprep.subr.mxu0 0.0
    %196 = vmatpush1.msra.mxu0 %v67
    %197 = vmatprep.subr.mxu0 0.0
    %198 = vmatpush1.msra.mxu0 %v66
    %199 = vmatprep.subr.mxu0 0.0
    %200 = vmatpush1.msra.mxu0 %v65
    %201 = vmatprep.subr.mxu0 0.0
    %202 = vmatpush1.msra.mxu0 %v64
    %203 = vmatprep.subr.mxu0 0.0
    %204 = vmatpush1.msra.mxu0 %v63
    %205 = vmatprep.subr.mxu0 0.0
    %206 = vmatpush1.msra.mxu0 %v62
    %207 = vmatprep.subr.mxu0 0.0
    %208 = vmatpush1.msra.mxu0 %v61
    %209 = vmatprep.subr.mxu0 0.0
    %210 = vmatpush1.msra.mxu0 %v60
    %211 = vmatprep.subr.mxu0 0.0
    %212 = vmatpush1.msra.mxu0 %v59
    %213 = vmatprep.subr.mxu0 0.0
    %214 = vmatpush1.msra.mxu0 %v58
    %215 = vmatprep.subr.mxu0 0.0
    %216 = vmatpush2.msra.mxu0 %v89
    %217 = vmatprep.subr.mxu0 0.0
    %218 = vmatpush2.msra.mxu0 %v88
    %219 = vmatprep.subr.mxu0 0.0
    %220 = vmatpush2.msra.mxu0 %v87
    %221 = vmatprep.subr.mxu0 0.0
    %222 = vmatpush2.msra.mxu0 %v86
    %223 = vmatprep.subr.mxu0 0.0
    %224 = vmatpush2.msra.mxu0 %v85
    %225 = vmatprep.subr.mxu0 0.0
    %226 = vmatpush2.msra.mxu0 %v84
    %227 = vmatprep.subr.mxu0 0.0
    %228 = vmatpush2.msra.mxu0 %v83
    %229 = vmatprep.subr.mxu0 0.0
    %230 = vmatpush2.msra.mxu0 %v82
    %231 = vmatprep.subr.mxu0 0.0
    %232 = vmatpush2.msra.mxu0 %v81
    %233 = vmatprep.subr.mxu0 0.0
    %234 = vmatpush2.msra.mxu0 %v80
    %235 = vmatprep.subr.mxu0 0.0
    %236 = vmatpush2.msra.mxu0 %v79
    %237 = vmatprep.subr.mxu0 0.0
    %238 = vmatpush2.msra.mxu0 %v78
    %239 = vmatprep.subr.mxu0 0.0
    %240 = vmatpush2.msra.mxu0 %v77
    %241 = vmatprep.subr.mxu0 0.0
    %242 = vmatpush2.msra.mxu0 %v76
    %243 = vmatprep.subr.mxu0 0.0
    %244 = vmatpush2.msra.mxu0 %v75
    %245 = vmatprep.subr.mxu0 0.0
    %246 = vmatpush2.msra.mxu0 %v74
    %247 = vmatprep.mubr.f32.mxu0 %v21
    %248 = vmatmul.mubr.f32.gmra.mxu0 %v20
    %v249 = vpop.f32.mrf.mxu0
    %v250 = vadd.f32 %v175, %v249
    %v251 = vpop.f32.mrf.mxu0
    %252 = vmatprep.mubr.f32.mxu0 %v25
    %253 = vmatmul.mubr.f32.gmra.mxu0 %v24
    %v254 = vpop.f32.mrf.mxu0
    %v255 = vadd.f32 %v180, %v254
    %v256 = vpop.f32.mrf.mxu0
    %257 = vdwg.mxu0
    %260 = vrot.lane.b32.xlu0 %v250, 127
    %v261 = vpop.permute.xlu0 %260
    %262 = vrot.lane.b32.xlu0 %v255, 127
    %v263 = vpop.permute.xlu0 %262
    %v266 = vsub.f32 %v250, %v261
    %v267 = vsub.f32 %v255, %v263
    %v268 = vmul.f32 %v266, 1.442695
    %v269 = vpow.pop %v268
    %v270 = vmul.f32 %v267, 1.442695
    %v271 = vpow.pop %v270
    %v272 = vadd.f32 %v269, 1.0
    %v273 = vadd.f32 %v271, 1.0
    %v274 = vrcp.pop %v272
    %v275 = vmul.f32 1.0, %v274
    %v276 = vrcp.pop %v273
    %v277 = vmul.f32 1.0, %v276
    %v278 = vsub.f32 1.0, %v275
    %v279 = vsub.f32 1.0, %v277
    %282 = vrot.lane.b32.xlu0 %v275, 1
    %v283 = vpop.permute.xlu0 %282
    %284 = vrot.lane.b32.xlu0 %v277, 1
    %v285 = vpop.permute.xlu0 %284
    %vm288 = vcmask 7168
    %v289 = vsel %vm288, %v278, %v283
    %v290 = vsel %vm288, %v279, %v285
    %vm291 = vcmask 15360
    %v292 = vsel %vm291, %v289, %v278
    %v293 = vsel %vm291, %v290, %v279
    %vm294 = vcmask 23552
    %v295 = vsel %vm294, %v292, %v283
    %v296 = vsel %vm294, %v293, %v285
    %v297 = vld [vmem:[%s3] sm:$0xff]
    %v299 = vcombine.high %v297, %v297
    %vm300 = vcmask 31744
    %v302 = vsel %vm300, %v295, 0
    %v305 = vsel %vm300, %v296, 0
    %vm307 = vcmask 1043456
    %v308 = vsel %vm307, %v297, 0
    %v310 = vsel %vm307, %v299, 0
    %312 = vmatprep.subr.mxu0 0.0
    %313 = vmatpush1.msra.mxu0 0.0
    %314 = vmatprep.subr.mxu0 0.0
    %315 = vmatpush1.msra.mxu0 0.0
    %316 = vmatprep.subr.mxu0 0.0
    %317 = vmatpush1.msra.mxu0 0.0
    %318 = vmatprep.subr.mxu0 0.0
    %319 = vmatpush1.msra.mxu0 0.0
    %320 = vmatprep.subr.mxu0 0.0
    %321 = vmatpush1.msra.mxu0 0.0
    %322 = vmatprep.subr.mxu0 0.0
    %323 = vmatpush1.msra.mxu0 0.0
    %324 = vmatprep.subr.mxu0 0.0
    %325 = vmatpush1.msra.mxu0 0.0
    %326 = vmatprep.subr.mxu0 0.0
    %327 = vmatpush1.msra.mxu0 0.0
    %328 = vmatprep.subr.mxu0 0.0
    %329 = vmatpush1.msra.mxu0 0.0
    %330 = vmatprep.subr.mxu0 0.0
    %331 = vmatpush1.msra.mxu0 0.0
    %332 = vmatprep.subr.mxu0 0.0
    %333 = vmatpush1.msra.mxu0 0.0
    %334 = vmatprep.subr.mxu0 0.0
    %335 = vmatpush1.msra.mxu0 0.0
    %336 = vmatprep.subr.mxu0 0.0
    %337 = vmatpush1.msra.mxu0 0.0
    %338 = vmatprep.subr.mxu0 0.0
    %339 = vmatpush1.msra.mxu0 0.0
    %340 = vmatprep.subr.mxu0 0.0
    %341 = vmatpush1.msra.mxu0 0.0
    %342 = vmatprep.subr.mxu0 %v310
    %343 = vmatpush1.msra.mxu0 %v308
    %344 = vmatprep.subr.mxu0 0.0
    %345 = vmatpush2.msra.mxu0 0.0
    %346 = vmatprep.subr.mxu0 0.0
    %347 = vmatpush2.msra.mxu0 0.0
    %348 = vmatprep.subr.mxu0 0.0
    %349 = vmatpush2.msra.mxu0 0.0
    %350 = vmatprep.subr.mxu0 0.0
    %351 = vmatpush2.msra.mxu0 0.0
    %352 = vmatprep.subr.mxu0 0.0
    %353 = vmatpush2.msra.mxu0 0.0
    %354 = vmatprep.subr.mxu0 0.0
    %355 = vmatpush2.msra.mxu0 0.0
    %356 = vmatprep.subr.mxu0 0.0
    %357 = vmatpush2.msra.mxu0 0.0
    %358 = vmatprep.subr.mxu0 0.0
    %359 = vmatpush2.msra.mxu0 0.0
    %360 = vmatprep.subr.mxu0 0.0
    %361 = vmatpush2.msra.mxu0 0.0
    %362 = vmatprep.subr.mxu0 0.0
    %363 = vmatpush2.msra.mxu0 0.0
    %364 = vmatprep.subr.mxu0 0.0
    %365 = vmatpush2.msra.mxu0 0.0
    %366 = vmatprep.subr.mxu0 0.0
    %367 = vmatpush2.msra.mxu0 0.0
    %368 = vmatprep.subr.mxu0 0.0
    %369 = vmatpush2.msra.mxu0 0.0
    %370 = vmatprep.subr.mxu0 0.0
    %371 = vmatpush2.msra.mxu0 0.0
    %372 = vmatprep.subr.mxu0 0.0
    %373 = vmatpush2.msra.mxu0 0.0
    %374 = vmatprep.subr.mxu0 0.0
    %375 = vmatpush2.msra.mxu0 0.0
    %376 = vmatprep.mubr.f32.mxu0 0.0
    %377 = vmatmul.mubr.f32.gmra.mxu0 %v302
    %v378 = vpop.f32.mrf.mxu0
    %v379 = vadd.f32 0.0, %v378
    %v380 = vpop.f32.mrf.mxu0
    %v381 = vadd.f32 0.0, %v380
    %382 = vmatprep.mubr.f32.mxu0 0.0
    %383 = vmatmul.mubr.f32.gmra.mxu0 %v305
    %v384 = vpop.f32.mrf.mxu0
    %v385 = vadd.f32 0.0, %v384
    %v386 = vpop.f32.mrf.mxu0
    %v387 = vadd.f32 0.0, %v386
    %388 = vdwg.mxu0
    %389 = vst [vmem:[#allocation2] sm:$0xff] %v379
    %390 = vst [vmem:[#allocation2 + $0x8] sm:$0xff] %v381
    %391 = vst [vmem:[#allocation2 + $0x10] sm:$0xff] %v385
    %392 = vst [vmem:[#allocation2 + $0x18] sm:$0xff] %v387
    // Predicated region
    $region18: #{tpu_custom_call.1} parent=1 // pred_check
      _
    $region19: #{tpu_custom_call.1} parent=1 // pred_check_branch
      %394 = sbr.rel (0) target = $region21
    $region20: #{tpu_custom_call.1} parent=1 // pred_region
      %s396 = ssub.s32 512, 512
      %397 = vsyncadd [#allocation3], %s396
      %s398 = sshll.u32 [#allocation2], 4
      %s399 = int_to_ptr.vmem [resolvable:$true] %s398
      %404 = dma.vmem_to_hbm [thread:$0]  %s399, 512, %s4, [#allocation3], 256, 256, 16
    $region21: #{tpu_custom_call.1} parent=1 // pred_fallthru
      _
    // Predicated region
    $region22: #{tpu_custom_call.1} parent=1 // pred_check
      _
    $region23: #{tpu_custom_call.1} parent=1 // pred_check_branch
      %406 = sbr.rel (0) target = $region25
    $region24: #{tpu_custom_call.1} parent=1 // pred_region
      %407 = dma.done [#allocation3], 512
    $region25: #{tpu_custom_call.1} parent=1 // pred_fallthru
      _
    %408 = vsyncpa [#allocation3], 1

</llo_original>
